<compile_context>
chip_gen: v6e
topology: v6e:2x2x1
jax: 0.10.0
libtpu: 0.0.40
codegen_flags: <defaults>
</compile_context>

<pallas_src>
import functools

import jax
import jax.numpy as jnp
from jax.experimental import pallas as pl
from jax.experimental.pallas import tpu as pltpu

LANES = 128
MAX_TILE_ROWS = 4096          # 4096 x 128 x 4B = 2 MiB per f32 input block


def _mape_sum_kernel(x_ref, t_ref, out_ref, acc_ref, *,
                     eps, n_rows, tile_rows, tiles_per_core):
    c = pl.program_id(0)          # parallel (core) axis
    i = pl.program_id(1)          # tile index within this core's range

    @pl.when(i == 0)
    def _():
        acc_ref[...] = jnp.zeros_like(acc_ref)

    # Global row index of every element in this block. Rows >= n_rows are
    # out-of-bounds garbage (ragged last tile / clamped index_map) -> masked.
    g_tile = c * tiles_per_core + i
    row0 = g_tile * tile_rows
    row_ids = row0 + jax.lax.broadcasted_iota(jnp.int32, (tile_rows, LANES), 0)
    valid = row_ids < n_rows

    x = x_ref[...].astype(jnp.float32)
    t = t_ref[...].astype(jnp.float32)
    ratio = jnp.abs((x - t) / (t + eps))
    contrib = jnp.where(valid, ratio, 0.0)

    # (tile_rows, 128) -> (tile_rows//8, 8, 128): leading-axis sum is pure
    # VALU vreg adds (no cross-lane / XLU work per step).
    acc_ref[...] += contrib.reshape(tile_rows // 8, 8, LANES).sum(axis=0)

    @pl.when(i == pl.num_programs(1) - 1)
    def _():
        out_ref[...] = acc_ref[...].reshape(1, 8, LANES)


def mape(input_arr, target_arr, eps=1e-8):
    assert input_arr.shape == target_arr.shape
    n = input_arr.size

    x = input_arr.reshape(-1)
    t = target_arr.reshape(-1)

    # Only pad the (<128-element) tail when the flat size is not lane-aligned;
    # zero/zero pads contribute |0/(0+eps)| = 0 to the running sum.
    if n % LANES:
        pad = LANES - n % LANES
        x = jnp.concatenate([x, jnp.zeros((pad,), x.dtype)])
        t = jnp.concatenate([t, jnp.zeros((pad,), t.dtype)])

    rows = x.size // LANES
    x2 = x.reshape(rows, LANES)
    t2 = t.reshape(rows, LANES)

    # Biggest row tile that is a multiple of 8 and <= MAX_TILE_ROWS.
    tile_rows = min(MAX_TILE_ROWS, ((rows + 7) // 8) * 8)
    num_tiles = pl.cdiv(rows, tile_rows)

    # Split the tile loop across two cores (used by v7x megacore; serial on
    # single-TC chips).
    ncores = 2 if num_tiles >= 2 else 1
    tiles_per_core = pl.cdiv(num_tiles, ncores)

    def in_map(c, i):
        # Clamp so the last (possibly empty) per-core tile stays in bounds;
        # the kernel masks it out via the unclamped global row index.
        return (jnp.minimum(c * tiles_per_core + i, num_tiles - 1), 0)

    kernel = functools.partial(
        _mape_sum_kernel,
        eps=float(eps),
        n_rows=rows,
        tile_rows=tile_rows,
        tiles_per_core=tiles_per_core,
    )

    itemsize = jnp.dtype(x2.dtype).itemsize
    cost = pl.CostEstimate(
        flops=6 * x2.size,
        transcendentals=0,
        bytes_accessed=2 * x2.size * itemsize + ncores * 8 * LANES * 4,
    )

    partial_sums = pl.pallas_call(
        kernel,
        out_shape=jax.ShapeDtypeStruct((ncores, 8, LANES), jnp.float32),
        grid_spec=pltpu.PrefetchScalarGridSpec(
            num_scalar_prefetch=0,
            grid=(ncores, tiles_per_core),
            in_specs=[
                pl.BlockSpec((tile_rows, LANES), in_map),
                pl.BlockSpec((tile_rows, LANES), in_map),
            ],
            out_specs=pl.BlockSpec((1, 8, LANES), lambda c, i: (c, 0, 0)),
            scratch_shapes=[pltpu.VMEM((8, LANES), jnp.float32)],
        ),
        compiler_params=pltpu.CompilerParams(
            dimension_semantics=("parallel", "arbitrary"),
            vmem_limit_bytes=32 * 1024 * 1024,
        ),
        cost_estimate=cost,
    )(x2, t2)

    # Single cross-lane/core reduction + mean normalization in the wrapper.
    return (jnp.sum(partial_sums) / jnp.float32(n)).astype(jnp.float32)


if __name__ == "__main__":
    key = jax.random.PRNGKey(0)
    k1, k2 = jax.random.split(key)
    shape = (2, 4, 16, 16)
    inp = jax.random.normal(k1, shape, dtype=jnp.float32)
    tgt = jax.random.normal(k2, shape, dtype=jnp.float32)

    out = mape(inp, tgt)
    out = jax.block_until_ready(out)

    # Pure-JAX reference check (matches the PyTorch module's formula).
    ref = jnp.mean(jnp.abs((inp - tgt) / (tgt + 1e-8)))
    assert jnp.allclose(out, ref, rtol=1e-4, atol=1e-6), (out, ref)

    print("KERNEL_OK")
</pallas_src>

<mosaic_0001>
module attributes {stable_mosaic.version = 11 : i64} {
  func.func @_mape_sum_kernel(%arg0: i32, %arg1: i32, %arg2: memref<16x128xf32, #tpu.memory_space<vmem>>, %arg3: memref<16x128xf32, #tpu.memory_space<vmem>>, %arg4: memref<1x8x128xf32, #tpu.memory_space<vmem>>, %arg5: memref<8x128xf32, #tpu.memory_space<vmem>>) attributes {dimension_semantics = [#tpu.dimension_semantics<parallel>, #tpu.dimension_semantics<arbitrary>], iteration_bounds = array<i64: 1, 1>, scalar_prefetch = 0 : i64, scratch_operands = 1 : i64, tpu.core_type = #tpu.core_type<tc>, window_params = [{transform_indices = @transform_0, window_bounds = array<i64: 16, 128>}, {transform_indices = @transform_1, window_bounds = array<i64: 16, 128>}, {transform_indices = @transform_2, window_bounds = array<i64: 1, 8, 128>}]} {
    %c0_i32 = arith.constant 0 : i32
    %0 = arith.cmpi eq, %arg1, %c0_i32 : i32
    %1 = arith.extui %0 : i1 to i32
    %c0_i32_0 = arith.constant 0 : i32
    %2 = arith.cmpi ne, %1, %c0_i32_0 : i32
    scf.if %2 {
      %cst_13 = arith.constant 0.000000e+00 : f32
      %28 = vector.broadcast %cst_13 : f32 to vector<8x128xf32>
      %c0_14 = arith.constant 0 : index
      %c0_15 = arith.constant 0 : index
      %29 = vector.load %arg5[%c0_14, %c0_15] : memref<8x128xf32, #tpu.memory_space<vmem>>, vector<8x128xf32>
      tpu.vector_store %arg5[%c0_14, %c0_15], %28 {strides = array<i32>} : memref<8x128xf32, #tpu.memory_space<vmem>>, vector<8x128xf32>,
    } else {
    }
    %c1_i32 = arith.constant 1 : i32
    %3 = arith.muli %arg0, %c1_i32 : i32
    %4 = arith.addi %3, %arg1 : i32
    %c16_i32 = arith.constant 16 : i32
    %5 = arith.muli %4, %c16_i32 : i32
    %6 = tpu.iota {dimensions = array<i32: 0>} : vector<16x128xi32>
    %7 = vector.broadcast %5 : i32 to vector<16x128xi32>
    %8 = arith.addi %7, %6 : vector<16x128xi32>
    %c16_i32_1 = arith.constant 16 : i32
    %9 = vector.broadcast %c16_i32_1 : i32 to vector<16x128xi32>
    %10 = arith.cmpi slt, %8, %9 : vector<16x128xi32>
    %c0 = arith.constant 0 : index
    %c0_2 = arith.constant 0 : index
    %11 = vector.load %arg2[%c0, %c0_2] : memref<16x128xf32, #tpu.memory_space<vmem>>, vector<16x128xf32>
    %c0_3 = arith.constant 0 : index
    %c0_4 = arith.constant 0 : index
    %12 = vector.load %arg3[%c0_3, %c0_4] : memref<16x128xf32, #tpu.memory_space<vmem>>, vector<16x128xf32>
    %13 = arith.subf %11, %12 : vector<16x128xf32>
    %cst = arith.constant 9.99999993E-9 : f32
    %14 = vector.broadcast %cst : f32 to vector<16x128xf32>
    %15 = arith.addf %12, %14 : vector<16x128xf32>
    %16 = arith.divf %13, %15 : vector<16x128xf32>
    %17 = math.absf %16 : vector<16x128xf32>
    %cst_5 = arith.constant 0.000000e+00 : f32
    %18 = vector.broadcast %cst_5 : f32 to vector<16x128xf32>
    %19 = arith.select %10, %17, %18 : vector<16x128xi1>, vector<16x128xf32>
    %c0_6 = arith.constant 0 : index
    %c0_7 = arith.constant 0 : index
    %20 = vector.load %arg5[%c0_6, %c0_7] : memref<8x128xf32, #tpu.memory_space<vmem>>, vector<8x128xf32>
    %21 = vector.shape_cast %19 : vector<16x128xf32> to vector<2x8x128xf32>
    %cst_8 = arith.constant dense<0.000000e+00> : vector<8x128xf32>
    %22 = vector.multi_reduction <add>, %21, %cst_8 [0] : vector<2x8x128xf32> to vector<8x128xf32>
    %23 = arith.addf %20, %22 : vector<8x128xf32>
    %c0_9 = arith.constant 0 : index
    %c0_10 = arith.constant 0 : index
    %24 = vector.load %arg5[%c0_9, %c0_10] : memref<8x128xf32, #tpu.memory_space<vmem>>, vector<8x128xf32>
    tpu.vector_store %arg5[%c0_9, %c0_10], %23 {strides = array<i32>} : memref<8x128xf32, #tpu.memory_space<vmem>>, vector<8x128xf32>,
    %c0_i32_11 = arith.constant 0 : i32
    %25 = arith.cmpi eq, %arg1, %c0_i32_11 : i32
    %26 = arith.extui %25 : i1 to i32
    %c0_i32_12 = arith.constant 0 : i32
    %27 = arith.cmpi ne, %26, %c0_i32_12 : i32
    scf.if %27 {
      %c0_13 = arith.constant 0 : index
      %c0_14 = arith.constant 0 : index
      %28 = vector.load %arg5[%c0_13, %c0_14] : memref<8x128xf32, #tpu.memory_space<vmem>>, vector<8x128xf32>
      %29 = vector.shape_cast %28 : vector<8x128xf32> to vector<1x8x128xf32>
      %c0_15 = arith.constant 0 : index
      %c0_16 = arith.constant 0 : index
      %c0_17 = arith.constant 0 : index
      %30 = vector.load %arg4[%c0_15, %c0_16, %c0_17] : memref<1x8x128xf32, #tpu.memory_space<vmem>>, vector<1x8x128xf32>
      tpu.vector_store %arg4[%c0_15, %c0_16, %c0_17], %29 {strides = array<i32>} : memref<1x8x128xf32, #tpu.memory_space<vmem>>, vector<1x8x128xf32>,
    } else {
    }
    return
  }
  func.func @transform_0(%arg0: i32, %arg1: i32) -> (i32, i32) {
    %c1_i32 = arith.constant 1 : i32
    %0 = arith.muli %arg0, %c1_i32 : i32
    %1 = arith.addi %0, %arg1 : i32
    %c0_i32 = arith.constant 0 : i32
    %2 = arith.minsi %1, %c0_i32 : i32
    %c0_i32_0 = arith.constant 0 : i32
    %c0_i32_1 = arith.constant 0 : i32
    return %2, %c0_i32_0 : i32, i32
  }
  func.func @transform_1(%arg0: i32, %arg1: i32) -> (i32, i32) {
    %c1_i32 = arith.constant 1 : i32
    %0 = arith.muli %arg0, %c1_i32 : i32
    %1 = arith.addi %0, %arg1 : i32
    %c0_i32 = arith.constant 0 : i32
    %2 = arith.minsi %1, %c0_i32 : i32
    %c0_i32_0 = arith.constant 0 : i32
    %c0_i32_1 = arith.constant 0 : i32
    return %2, %c0_i32_0 : i32, i32
  }
  func.func @transform_2(%arg0: i32, %arg1: i32) -> (i32, i32, i32) {
    %c0_i32 = arith.constant 0 : i32
    %c0_i32_0 = arith.constant 0 : i32
    %c0_i32_1 = arith.constant 0 : i32
    return %arg0, %c0_i32, %c0_i32_0 : i32, i32, i32
  }
}

</mosaic_0001>

<llo_original>
// kernel: tpu_custom_call.1
$region0: #{tpu_custom_call.1}
  #allocation0 [shape = 'u32[]', space=smem, size = 0x4, offset = 0x4, fixed_abs, tag = 'smem constant byte address 0x4 - core index']
  #allocation1 [shape = 'u32[144,128]{1,0:T(1,128)}', space=vmem, size = 0x12000, scoped, tag = 'internal scratch']
  #allocation2 [shape = 'f32[8,128]{1,0:T(8,128)}', space=vmem, size = 0x1000, scoped, tag = 'scratch operand']
  %s0 = inlined_call_operand.hbm [shape: f32[16,128], index: 0, kind: input, shape index: {}]
  %s1 = inlined_call_operand.hbm [shape: f32[16,128], index: 1, kind: input, shape index: {}]
  %s2 = inlined_call_operand.hbm [shape: f32[1,8,128], index: 2, kind: output, shape index: {}]
  %s3 = sld [smem:[#allocation0]]
  $region34: #{tpu_custom_call.1} parent=0
    _
  %s5 = ssub.s32 1, %s3
  %s6 = scalar_select 0, %s5, %s3
  $region1: #{tpu_custom_call.1} parent=0
    #allocation3 [shape = 'u8[8192]{0}', space=vmem, size = 0x2000, scoped, tag = 'input window, operand 0, single buffered']
    #allocation4 [shape = 's32[1]{0}', space=sflag, size = 0x4, scoped, tag = 'scoped memory for tpu_custom_call.1']
    #allocation5 [shape = 's32[1]{0}', space=sflag, size = 0x4, scoped, tag = 'scoped memory for tpu_custom_call.1']
    #allocation6 [shape = 'u8[8192]{0}', space=vmem, size = 0x2000, scoped, tag = 'input window, operand 1, single buffered']
    #allocation7 [shape = 's32[1]{0}', space=sflag, size = 0x4, scoped, tag = 'scoped memory for tpu_custom_call.1']
    #allocation8 [shape = 'u8[4096]{0}', space=vmem, size = 0x1000, scoped, tag = 'output window, operand 0, single buffered']
    %7 = vsyncpa [#allocation4], 0
    %8 = vsyncpa [#allocation7], 0
    %9 = vsyncpa [#allocation5], 0
    // Predicated region
    $region2: #{tpu_custom_call.1} parent=1 // pred_check
      _
    $region3: #{tpu_custom_call.1} parent=1 // pred_check_branch
      %11 = sbr.rel (0) target = $region5
    $region4: #{tpu_custom_call.1} parent=1 // pred_region
      %s12 = sadd.s32 0, 0
      %p13 = scmp.lt.s32.totalorder %s12, 0
      %s14 = scalar_select %p13, %s12, 0
      %s15 = smul.u32 2, %s14
      %s17 = ssub.s32 256, 256
      %18 = vsyncadd [#allocation4], %s17
      %s19 = smul.addr %s15, 128
      %s20 = scalar_lea.hbm %s0, %s19
      %s21 = sshll.u32 [#allocation3], 4
      %s22 = int_to_ptr.vmem [resolvable:$true] %s21
      %27 = dma.hbm_to_vmem [thread:$0]  %s20, 256, %s22, [#allocation4], 128, 128, 8
    $region5: #{tpu_custom_call.1} parent=1 // pred_fallthru
      _
    // Predicated region
    $region6: #{tpu_custom_call.1} parent=1 // pred_check
      _
    $region7: #{tpu_custom_call.1} parent=1 // pred_check_branch
      %29 = sbr.rel (0) target = $region9
    $region8: #{tpu_custom_call.1} parent=1 // pred_region
      %s30 = sadd.s32 0, 0
      %p31 = scmp.lt.s32.totalorder %s30, 0
      %s32 = scalar_select %p31, %s30, 0
      %s33 = smul.u32 2, %s32
      %s35 = ssub.s32 256, 256
      %36 = vsyncadd [#allocation7], %s35
      %s37 = smul.addr %s33, 128
      %s38 = scalar_lea.hbm %s1, %s37
      %s39 = sshll.u32 [#allocation6], 4
      %s40 = int_to_ptr.vmem [resolvable:$true] %s39
      %45 = dma.hbm_to_vmem [thread:$0]  %s38, 256, %s40, [#allocation7], 128, 128, 8
    $region9: #{tpu_custom_call.1} parent=1 // pred_fallthru
      _
    // Predicated region
    $region10: #{tpu_custom_call.1} parent=1 // pred_check
      _
    $region11: #{tpu_custom_call.1} parent=1 // pred_check_branch
      %47 = sbr.rel (0) target = $region13
    $region12: #{tpu_custom_call.1} parent=1 // pred_region
      %48 = dma.done [#allocation4], 256
    $region13: #{tpu_custom_call.1} parent=1 // pred_fallthru
      _
    // Predicated region
    $region14: #{tpu_custom_call.1} parent=1 // pred_check
      _
    $region15: #{tpu_custom_call.1} parent=1 // pred_check_branch
      %50 = sbr.rel (0) target = $region17
    $region16: #{tpu_custom_call.1} parent=1 // pred_region
      %51 = dma.done [#allocation7], 256
    $region17: #{tpu_custom_call.1} parent=1 // pred_fallthru
      _
    %s52 = sadd.s32 0, 0
    %p53 = scmp.lt.s32.totalorder %s52, 0
    %s54 = scalar_select %p53, %s52, 0
    %s55 = smul.u32 2, %s54
    %s56 = sadd.s32 0, 0
    %p57 = scmp.lt.s32.totalorder %s56, 0
    %s58 = scalar_select %p57, %s56, 0
    %s59 = smul.u32 2, %s58
    %p60 = scmp.eq.s32.totalorder 0, 0
    // Predicated region
    $region18: #{tpu_custom_call.1} parent=1 // pred_check
      %p61 = pneg %p60
    $region19: #{tpu_custom_call.1} parent=1 // pred_check_branch
      %63 = sbr.rel (%p61) target = $region21
    $region20: #{tpu_custom_call.1} parent=1 // pred_region
      %64 = vst [vmem:[#allocation2] sm:$0xff] 0.0
    $region21: #{tpu_custom_call.1} parent=1 // pred_fallthru
      _
    %s65 = sadd.s32 0, 0
    %s66 = smul.u32 %s65, 16
    %v67 = vlaneseq
    %v68 = vshrl.u32 %v67, 7
    %v69 = vadd.s32 %v68, 8
    %v70 = vstv %s66
    %v71 = vadd.s32 %v70, %v68
    %v72 = vadd.s32 %v70, %v69
    %vm73 = vcmp.lt.s32.totalorder %v71, 16
    %vm74 = vcmp.lt.s32.totalorder %v72, 16
    %v75 = vld [vmem:[#allocation3] sm:$0xff]
    %v76 = vld [vmem:[#allocation3 + $0x8] sm:$0xff]
    %v77 = vld [vmem:[#allocation6] sm:$0xff]
    %v78 = vld [vmem:[#allocation6 + $0x8] sm:$0xff]
    %v79 = vsub.f32 %v75, %v77
    %v80 = vsub.f32 %v76, %v78
    %v81 = vadd.f32 %v77, 1e-08
    %v82 = vadd.f32 %v78, 1e-08
    %v83 = vrcp.pop %v81
    %v84 = vmul.f32 %v79, %v83
    %v85 = vrcp.pop %v82
    %v86 = vmul.f32 %v80, %v85
    %v87 = vand.u32 2147483647, %v84
    %v88 = vand.u32 2147483647, %v86
    %v89 = vsel %vm73, %v87, 0.0
    %v90 = vsel %vm74, %v88, 0.0
    %v91 = vld [vmem:[#allocation2] sm:$0xff]
    %v92 = vadd.f32 %v89, %v90
    %v93 = vadd.f32 %v91, %v92
    %94 = vst [vmem:[#allocation2] sm:$0xff] %v93
    // Predicated region
    $region22: #{tpu_custom_call.1} parent=1 // pred_check
      %p95 = pneg %p60
    $region23: #{tpu_custom_call.1} parent=1 // pred_check_branch
      %97 = sbr.rel (%p95) target = $region25
    $region24: #{tpu_custom_call.1} parent=1 // pred_region
      %v98 = vld [vmem:[#allocation2] sm:$0xff]
      %99 = vst [vmem:[#allocation8] sm:$0xff] %v98
    $region25: #{tpu_custom_call.1} parent=1 // pred_fallthru
      _
    // Predicated region
    $region26: #{tpu_custom_call.1} parent=1 // pred_check
      _
    $region27: #{tpu_custom_call.1} parent=1 // pred_check_branch
      %101 = sbr.rel (0) target = $region29
    $region28: #{tpu_custom_call.1} parent=1 // pred_region
      %s103 = ssub.s32 128, 128
      %104 = vsyncadd [#allocation5], %s103
      %s106 = sshll.u32 [#allocation8], 4
      %s107 = int_to_ptr.vmem [resolvable:$true] %s106
      %109 = dma.vmem_to_hbm [thread:$0]  %s107, 128, %s2, [#allocation5]
    $region29: #{tpu_custom_call.1} parent=1 // pred_fallthru
      _
    // Predicated region
    $region30: #{tpu_custom_call.1} parent=1 // pred_check
      _
    $region31: #{tpu_custom_call.1} parent=1 // pred_check_branch
      %111 = sbr.rel (0) target = $region33
    $region32: #{tpu_custom_call.1} parent=1 // pred_region
      %112 = dma.done [#allocation5], 128
    $region33: #{tpu_custom_call.1} parent=1 // pred_fallthru
      _
    %113 = vsyncpa [#allocation4], 1
    %114 = vsyncpa [#allocation7], 1
    %115 = vsyncpa [#allocation5], 1

</llo_original>
